<compile_context>
chip_gen: v7x
topology: tpu7x:2x2x1
jax: 0.10.0
libtpu: 0.0.40
codegen_flags: <defaults>
</compile_context>

<pallas_src>
import functools

import jax
import jax.numpy as jnp
from jax.experimental import pallas as pl
from jax.experimental.pallas import tpu as pltpu


def _encoder_kernel(x_ref,
                    w1_ref, b1_ref,
                    w2_ref, b2_ref,
                    wh_ref, bh_ref,          # fused [h2, 2*z_dim] head
                    eps_ref,
                    out_ref):                # packed (TB, 3*z_dim): [z | mu | log_var]
    z_dim = eps_ref.shape[1]

    # hidden layer 1: relu(x @ W1 + b1)
    h = jnp.dot(x_ref[...], w1_ref[...], preferred_element_type=jnp.float32)
    h = jnp.maximum(h + b1_ref[...], 0.0)

    # hidden layer 2: relu(h @ W2 + b2)
    h = jnp.dot(h, w2_ref[...], preferred_element_type=jnp.float32)
    h = jnp.maximum(h + b2_ref[...], 0.0)

    # fused GaussianSample head: [mu | logvar_pre] in one MXU pass
    head = jnp.dot(h, wh_ref[...], preferred_element_type=jnp.float32) + bh_ref[...]
    mu = head[:, :z_dim]
    lv_pre = head[:, z_dim:]

    # softplus, numerically stable: max(x,0) + log1p(exp(-|x|))
    log_var = jnp.maximum(lv_pre, 0.0) + jnp.log1p(jnp.exp(-jnp.abs(lv_pre)))

    std = jnp.exp(0.5 * log_var)
    z = mu + std * eps_ref[...]

    # single lane-contiguous packed store
    out_ref[...] = jnp.concatenate([z, mu, log_var], axis=-1).astype(out_ref.dtype)


@functools.partial(jax.jit, static_argnames=("block_rows",))
def encoder_forward(x, params, eps, *, block_rows=512):
    """x: [B, x_dim] f32; params: dict of pre-transposed weights; eps: [B, z_dim] f32."""
    B, x_dim = x.shape
    h1 = params["w1"].shape[1]
    h2 = params["w2"].shape[1]
    z_dim = params["wmu"].shape[1]

    # fused head weights (done once per jit trace; constant-folded for fixed params)
    wh = jnp.concatenate([params["wmu"], params["wlv"]], axis=1)   # [h2, 2*z_dim]
    bh = jnp.concatenate([params["bmu"], params["blv"]], axis=1)   # [1,  2*z_dim]

    # batch tile: multiple of 8 sublanes (or the full batch if it is small)
    tb = B if B <= block_rows else block_rows
    grid = (pl.cdiv(B, tb),)

    resident = lambda i: (0, 0)   # weights / biases: same block every grid step
    tiled = lambda i: (i, 0)      # activations / noise / outputs: tiled over batch

    in_specs = [
        pl.BlockSpec((tb, x_dim), tiled),
        pl.BlockSpec((x_dim, h1), resident),
        pl.BlockSpec((1, h1), resident),
        pl.BlockSpec((h1, h2), resident),
        pl.BlockSpec((1, h2), resident),
        pl.BlockSpec((h2, 2 * z_dim), resident),
        pl.BlockSpec((1, 2 * z_dim), resident),
        pl.BlockSpec((tb, z_dim), tiled),
    ]
    out_specs = pl.BlockSpec((tb, 3 * z_dim), tiled)

    weight_bytes = 4 * (x_dim * h1 + h1 + h1 * h2 + h2 + h2 * 2 * z_dim + 2 * z_dim)
    cost = pl.CostEstimate(
        flops=2 * B * (x_dim * h1 + h1 * h2 + h2 * 2 * z_dim),
        transcendentals=3 * B * z_dim,
        bytes_accessed=4 * B * (x_dim + z_dim + 3 * z_dim) + weight_bytes,
    )

    packed = pl.pallas_call(
        _encoder_kernel,
        out_shape=jax.ShapeDtypeStruct((B, 3 * z_dim), jnp.float32),
        grid=grid,
        in_specs=in_specs,
        out_specs=out_specs,
        compiler_params=pltpu.CompilerParams(
            dimension_semantics=("parallel",)),
        cost_estimate=cost,
    )(x, params["w1"], params["b1"], params["w2"], params["b2"], wh, bh, eps)

    z = packed[:, :z_dim]
    mu = packed[:, z_dim:2 * z_dim]
    log_var = packed[:, 2 * z_dim:]
    return z, mu, log_var


def init_params(key, x_dim, h_dims, z_dim):
    """Deterministic synthetic init. Weights stored as [in, out]; biases as [1, out]."""
    dims = [x_dim, *h_dims]
    keys = jax.random.split(key, 8)
    p = {}
    # hidden layers
    p["w1"] = 0.1 * jax.random.normal(keys[0], (dims[0], dims[1]), jnp.float32)
    p["b1"] = 0.1 * jax.random.normal(keys[1], (1, dims[1]), jnp.float32)
    p["w2"] = 0.1 * jax.random.normal(keys[2], (dims[1], dims[2]), jnp.float32)
    p["b2"] = 0.1 * jax.random.normal(keys[3], (1, dims[2]), jnp.float32)
    # GaussianSample head
    p["wmu"] = 0.1 * jax.random.normal(keys[4], (dims[2], z_dim), jnp.float32)
    p["bmu"] = 0.1 * jax.random.normal(keys[5], (1, z_dim), jnp.float32)
    p["wlv"] = 0.1 * jax.random.normal(keys[6], (dims[2], z_dim), jnp.float32)
    p["blv"] = 0.1 * jax.random.normal(keys[7], (1, z_dim), jnp.float32)
    return p


def reference_forward(x, p, eps):
    """Pure-JAX reference (matches PyTorch semantics)."""
    h = jax.nn.relu(x @ p["w1"] + p["b1"])
    h = jax.nn.relu(h @ p["w2"] + p["b2"])
    mu = h @ p["wmu"] + p["bmu"]
    log_var = jax.nn.softplus(h @ p["wlv"] + p["blv"])
    z = mu + jnp.exp(0.5 * log_var) * eps
    return z, mu, log_var


if __name__ == "__main__":
    # dims = [x_dim, [hidden_dims], z_dim]
    x_dim, h_dims, z_dim = 32, [64, 32], 16
    batch = 24        # small demo batch; multiple of the 8-row tile used below

    key = jax.random.PRNGKey(0)
    k_x, k_eps, k_p = jax.random.split(key, 3)

    x = jax.random.normal(k_x, (batch, x_dim), jnp.float32)
    eps = jax.random.normal(k_eps, (batch, z_dim), jnp.float32)  # reparameterization noise
    params = init_params(k_p, x_dim, h_dims, z_dim)

    # block_rows=8 so the small demo still exercises the batch grid (3 steps);
    # production default is 512 rows per step.
    z, mu, log_var = encoder_forward(x, params, eps, block_rows=8)
    jax.block_until_ready((z, mu, log_var))

    # correctness check against pure-JAX reference
    z_r, mu_r, lv_r = reference_forward(x, params, eps)
    assert jnp.allclose(z, z_r, atol=1e-4, rtol=1e-4)
    assert jnp.allclose(mu, mu_r, atol=1e-4, rtol=1e-4)
    assert jnp.allclose(log_var, lv_r, atol=1e-4, rtol=1e-4)

    print("KERNEL_OK")
</pallas_src>

<mosaic_0001>
module attributes {stable_mosaic.version = 11 : i64} {
  func.func @_encoder_kernel(%arg0: i32, %arg1: memref<8x32xf32, #tpu.memory_space<vmem>>, %arg2: memref<32x64xf32, #tpu.memory_space<vmem>>, %arg3: memref<1x64xf32, #tpu.memory_space<vmem>>, %arg4: memref<64x32xf32, #tpu.memory_space<vmem>>, %arg5: memref<1x32xf32, #tpu.memory_space<vmem>>, %arg6: memref<32x32xf32, #tpu.memory_space<vmem>>, %arg7: memref<1x32xf32, #tpu.memory_space<vmem>>, %arg8: memref<8x16xf32, #tpu.memory_space<vmem>>, %arg9: memref<8x48xf32, #tpu.memory_space<vmem>>) attributes {dimension_semantics = [#tpu.dimension_semantics<parallel>], iteration_bounds = array<i64: 3>, scalar_prefetch = 0 : i64, scratch_operands = 0 : i64, tpu.core_type = #tpu.core_type<tc>, window_params = [{transform_indices = @transform_0, window_bounds = array<i64: 8, 32>}, {pipeline_mode = #tpu.pipeline_mode<synchronous>, transform_indices = @transform_1, window_bounds = array<i64: 32, 64>}, {pipeline_mode = #tpu.pipeline_mode<synchronous>, transform_indices = @transform_2, window_bounds = array<i64: 1, 64>}, {pipeline_mode = #tpu.pipeline_mode<synchronous>, transform_indices = @transform_3, window_bounds = array<i64: 64, 32>}, {pipeline_mode = #tpu.pipeline_mode<synchronous>, transform_indices = @transform_4, window_bounds = array<i64: 1, 32>}, {pipeline_mode = #tpu.pipeline_mode<synchronous>, transform_indices = @transform_5, window_bounds = array<i64: 32, 32>}, {pipeline_mode = #tpu.pipeline_mode<synchronous>, transform_indices = @transform_6, window_bounds = array<i64: 1, 32>}, {transform_indices = @transform_7, window_bounds = array<i64: 8, 16>}, {transform_indices = @transform_8, window_bounds = array<i64: 8, 48>}]} {
    %c0 = arith.constant 0 : index
    %c0_0 = arith.constant 0 : index
    %0 = vector.load %arg1[%c0, %c0_0] : memref<8x32xf32, #tpu.memory_space<vmem>>, vector<8x32xf32>
    %c0_1 = arith.constant 0 : index
    %c0_2 = arith.constant 0 : index
    %1 = vector.load %arg2[%c0_1, %c0_2] : memref<32x64xf32, #tpu.memory_space<vmem>>, vector<32x64xf32>
    %cst = arith.constant dense<0.000000e+00> : vector<8x64xf32>
    %2 = tpu.matmul %0, %1, %cst {dimension_numbers = #tpu.dot_dimension_numbers<[1], [0], [0], [1], [0, 0, 1, 1], [], []>} : vector<8x32xf32>, vector<32x64xf32>, vector<8x64xf32> -> vector<8x64xf32>
    %c0_3 = arith.constant 0 : index
    %c0_4 = arith.constant 0 : index
    %3 = vector.load %arg3[%c0_3, %c0_4] : memref<1x64xf32, #tpu.memory_space<vmem>>, vector<1x64xf32>
    %4 = vector.broadcast %3 : vector<1x64xf32> to vector<8x64xf32>
    %5 = arith.addf %2, %4 : vector<8x64xf32>
    %cst_5 = arith.constant 0.000000e+00 : f32
    %6 = vector.broadcast %cst_5 : f32 to vector<8x64xf32>
    %7 = arith.maximumf %5, %6 : vector<8x64xf32>
    %c0_6 = arith.constant 0 : index
    %c0_7 = arith.constant 0 : index
    %8 = vector.load %arg4[%c0_6, %c0_7] : memref<64x32xf32, #tpu.memory_space<vmem>>, vector<64x32xf32>
    %cst_8 = arith.constant dense<0.000000e+00> : vector<8x32xf32>
    %9 = tpu.matmul %7, %8, %cst_8 {dimension_numbers = #tpu.dot_dimension_numbers<[1], [0], [0], [1], [0, 0, 1, 1], [], []>} : vector<8x64xf32>, vector<64x32xf32>, vector<8x32xf32> -> vector<8x32xf32>
    %c0_9 = arith.constant 0 : index
    %c0_10 = arith.constant 0 : index
    %10 = vector.load %arg5[%c0_9, %c0_10] : memref<1x32xf32, #tpu.memory_space<vmem>>, vector<1x32xf32>
    %11 = vector.broadcast %10 : vector<1x32xf32> to vector<8x32xf32>
    %12 = arith.addf %9, %11 : vector<8x32xf32>
    %cst_11 = arith.constant 0.000000e+00 : f32
    %13 = vector.broadcast %cst_11 : f32 to vector<8x32xf32>
    %14 = arith.maximumf %12, %13 : vector<8x32xf32>
    %c0_12 = arith.constant 0 : index
    %c0_13 = arith.constant 0 : index
    %15 = vector.load %arg6[%c0_12, %c0_13] : memref<32x32xf32, #tpu.memory_space<vmem>>, vector<32x32xf32>
    %cst_14 = arith.constant dense<0.000000e+00> : vector<8x32xf32>
    %16 = tpu.matmul %14, %15, %cst_14 {dimension_numbers = #tpu.dot_dimension_numbers<[1], [0], [0], [1], [0, 0, 1, 1], [], []>} : vector<8x32xf32>, vector<32x32xf32>, vector<8x32xf32> -> vector<8x32xf32>
    %c0_15 = arith.constant 0 : index
    %c0_16 = arith.constant 0 : index
    %17 = vector.load %arg7[%c0_15, %c0_16] : memref<1x32xf32, #tpu.memory_space<vmem>>, vector<1x32xf32>
    %18 = vector.broadcast %17 : vector<1x32xf32> to vector<8x32xf32>
    %19 = arith.addf %16, %18 : vector<8x32xf32>
    %20 = vector.extract_strided_slice %19 {offsets = [0, 0], sizes = [8, 16], strides = [1, 1]} : vector<8x32xf32> to vector<8x16xf32>
    %21 = vector.extract_strided_slice %19 {offsets = [0, 16], sizes = [8, 16], strides = [1, 1]} : vector<8x32xf32> to vector<8x16xf32>
    %cst_17 = arith.constant 0.000000e+00 : f32
    %22 = vector.broadcast %cst_17 : f32 to vector<8x16xf32>
    %23 = arith.maximumf %21, %22 : vector<8x16xf32>
    %24 = math.absf %21 : vector<8x16xf32>
    %cst_18 = arith.constant 0.000000e+00 : f32
    %25 = vector.broadcast %cst_18 : f32 to vector<8x16xf32>
    %26 = arith.subf %25, %24 : vector<8x16xf32>
    %27 = math.exp %26 : vector<8x16xf32>
    %28 = math.log1p %27 : vector<8x16xf32>
    %29 = arith.addf %23, %28 : vector<8x16xf32>
    %cst_19 = arith.constant 5.000000e-01 : f32
    %30 = vector.broadcast %cst_19 : f32 to vector<8x16xf32>
    %31 = arith.mulf %30, %29 : vector<8x16xf32>
    %32 = math.exp %31 : vector<8x16xf32>
    %c0_20 = arith.constant 0 : index
    %c0_21 = arith.constant 0 : index
    %33 = vector.load %arg8[%c0_20, %c0_21] : memref<8x16xf32, #tpu.memory_space<vmem>>, vector<8x16xf32>
    %34 = arith.mulf %32, %33 : vector<8x16xf32>
    %35 = arith.addf %20, %34 : vector<8x16xf32>
    %36 = tpu.concatenate %35, %20, %29 in 1 : vector<8x16xf32>, vector<8x16xf32>, vector<8x16xf32> -> vector<8x48xf32>
    %c0_22 = arith.constant 0 : index
    %c0_23 = arith.constant 0 : index
    %37 = vector.load %arg9[%c0_22, %c0_23] : memref<8x48xf32, #tpu.memory_space<vmem>>, vector<8x48xf32>
    tpu.vector_store %arg9[%c0_22, %c0_23], %36 {strides = array<i32>} : memref<8x48xf32, #tpu.memory_space<vmem>>, vector<8x48xf32>,
    return
  }
  func.func @transform_0(%arg0: i32) -> (i32, i32) {
    %c0_i32 = arith.constant 0 : i32
    %c0_i32_0 = arith.constant 0 : i32
    return %arg0, %c0_i32 : i32, i32
  }
  func.func @transform_1(%arg0: i32) -> (i32, i32) {
    %c0_i32 = arith.constant 0 : i32
    %c0_i32_0 = arith.constant 0 : i32
    %c0_i32_1 = arith.constant 0 : i32
    return %c0_i32, %c0_i32_0 : i32, i32
  }
  func.func @transform_2(%arg0: i32) -> (i32, i32) {
    %c0_i32 = arith.constant 0 : i32
    %c0_i32_0 = arith.constant 0 : i32
    %c0_i32_1 = arith.constant 0 : i32
    return %c0_i32, %c0_i32_0 : i32, i32
  }
  func.func @transform_3(%arg0: i32) -> (i32, i32) {
    %c0_i32 = arith.constant 0 : i32
    %c0_i32_0 = arith.constant 0 : i32
    %c0_i32_1 = arith.constant 0 : i32
    return %c0_i32, %c0_i32_0 : i32, i32
  }
  func.func @transform_4(%arg0: i32) -> (i32, i32) {
    %c0_i32 = arith.constant 0 : i32
    %c0_i32_0 = arith.constant 0 : i32
    %c0_i32_1 = arith.constant 0 : i32
    return %c0_i32, %c0_i32_0 : i32, i32
  }
  func.func @transform_5(%arg0: i32) -> (i32, i32) {
    %c0_i32 = arith.constant 0 : i32
    %c0_i32_0 = arith.constant 0 : i32
    %c0_i32_1 = arith.constant 0 : i32
    return %c0_i32, %c0_i32_0 : i32, i32
  }
  func.func @transform_6(%arg0: i32) -> (i32, i32) {
    %c0_i32 = arith.constant 0 : i32
    %c0_i32_0 = arith.constant 0 : i32
    %c0_i32_1 = arith.constant 0 : i32
    return %c0_i32, %c0_i32_0 : i32, i32
  }
  func.func @transform_7(%arg0: i32) -> (i32, i32) {
    %c0_i32 = arith.constant 0 : i32
    %c0_i32_0 = arith.constant 0 : i32
    return %arg0, %c0_i32 : i32, i32
  }
  func.func @transform_8(%arg0: i32) -> (i32, i32) {
    %c0_i32 = arith.constant 0 : i32
    %c0_i32_0 = arith.constant 0 : i32
    return %arg0, %c0_i32 : i32, i32
  }
}

</mosaic_0001>

<llo_original>
// kernel: encoder_forward.1
$region0: #{encoder_forward.1}
  #allocation0 [shape = 'u32[]', space=smem, size = 0x4, offset = 0x4, fixed_abs, tag = 'smem constant byte address 0x4 - core index']
  #allocation1 [shape = 'u32[144,128]{1,0:T(1,128)}', space=vmem, size = 0x12000, scoped, tag = 'internal scratch']
  %s0 = inlined_call_operand.vmem [shape: f32[24,32], index: 0, kind: input, shape index: {}]
  %s1 = inlined_call_operand.vmem [shape: f32[32,64], index: 1, kind: input, shape index: {}]
  %s2 = inlined_call_operand.vmem [shape: f32[1,64], index: 2, kind: input, shape index: {}]
  %s3 = inlined_call_operand.vmem [shape: f32[64,32], index: 3, kind: input, shape index: {}]
  %s4 = inlined_call_operand.vmem [shape: f32[1,32], index: 4, kind: input, shape index: {}]
  %s5 = inlined_call_operand.vmem [shape: f32[32,32], index: 5, kind: input, shape index: {}]
  %s6 = inlined_call_operand.vmem [shape: f32[1,32], index: 6, kind: input, shape index: {}]
  %s7 = inlined_call_operand.vmem [shape: f32[24,16], index: 7, kind: input, shape index: {}]
  %s8 = inlined_call_operand.vmem [shape: f32[24,48], index: 8, kind: output, shape index: {}]
  %s9 = sld [smem:[#allocation0]]
  $region65: #{encoder_forward.1} parent=0
    _
  %s11 = ssub.s32 1, %s9
  %s12 = scalar_select 0, %s11, %s9
  loop: start=0, step=1, limit=5
  $region2: #{encoder_forward.1} parent=0 // loop_pre_header
    _
  $region3: #{encoder_forward.1} parent=0 // loop_header
    %s14 = sphi 0, %s18
    %p15 = scmp.ge.s32.totalorder %s14, 5
    %s24 = sphi 0, %s26
    %s27 = sphi 0, %s24
    %s28 = sphi 0, %s27
    %s44 = sphi 0, %s28
    %s48 = sphi 0, %s48
    %s50 = sphi 0, %s48
    %s51 = sphi 0, %s50
    %s65 = sphi 0, %s51
    %s69 = sphi 0, %s69
    %s71 = sphi 0, %s69
    %s72 = sphi 0, %s71
    %s86 = sphi 0, %s72
    %s90 = sphi 0, %s90
    %s92 = sphi 0, %s90
    %s93 = sphi 0, %s92
    %s107 = sphi 0, %s93
    %s111 = sphi 0, %s111
    %s113 = sphi 0, %s111
    %s114 = sphi 0, %s113
    %s128 = sphi 0, %s114
    %s132 = sphi 0, %s132
    %s134 = sphi 0, %s132
    %s135 = sphi 0, %s134
    %s149 = sphi 0, %s135
    %s153 = sphi 0, %s153
    %s155 = sphi 0, %s153
    %s156 = sphi 0, %s155
    %s170 = sphi 0, %s156
    %s176 = sphi 0, %s178
    %s179 = sphi 0, %s176
    %s180 = sphi 0, %s179
    %s196 = sphi 0, %s180
    %s202 = sphi 0, %s204
    %s205 = sphi 0, %s202
    %s206 = sphi 0, %s205
    %s222 = sphi 0, %s206
  $region4: #{encoder_forward.1} parent=0 // loop_header_branch
    %17 = sbr.rel (%p15) target = $region8
  $region5: #{encoder_forward.1} parent=0 // loop_body
    %s19 = ssub.s32 %s14, 1
    %s20 = ssub.s32 %s14, 2
    %s21 = sadd.s32 %s14, 1
    %s22 = ssub.s32 %s14, %s21
    %p23 = scmp.eq.s32.totalorder %s22, 0
    %s25 = sadd.s32 %s24, 1
    %s26 = scalar_select %p23, %s24, %s25
    %p29 = pneg %p23
    %p30 = scmp.eq.s32.totalorder %s14, 2
    %p31 = por %p29, %p30
    %p32 = scmp.ne.s32.totalorder %s24, %s27
    %p33 = scmp.eq.s32.totalorder %s14, 0
    %p34 = por %p32, %p33
    %p35 = scmp.ne.s32.totalorder %s24, %s27
    %p36 = scmp.eq.s32.totalorder %s19, 2
    %p37 = por %p35, %p36
    %p38 = scmp.ne.s32.totalorder %s27, %s28
    %p39 = scmp.eq.s32.totalorder %s19, 0
    %p40 = por %p38, %p39
    %p41 = scmp.ne.s32.totalorder %s27, %s28
    %p42 = scmp.eq.s32.totalorder %s20, 2
    %p43 = por %p41, %p42
    %p45 = scmp.ne.s32.totalorder %s28, %s44
    %p46 = scmp.eq.s32.totalorder %s20, 0
    %p47 = por %p45, %p46
    %s49 = sadd.s32 %s48, 1
    %p52 = scmp.eq.s32.totalorder %s14, 2
    %p53 = scmp.ne.s32.totalorder %s48, %s50
    %p54 = scmp.eq.s32.totalorder %s14, 0
    %p55 = por %p53, %p54
    %p56 = scmp.ne.s32.totalorder %s48, %s50
    %p57 = scmp.eq.s32.totalorder %s19, 2
    %p58 = por %p56, %p57
    %p59 = scmp.ne.s32.totalorder %s50, %s51
    %p60 = scmp.eq.s32.totalorder %s19, 0
    %p61 = por %p59, %p60
    %p62 = scmp.ne.s32.totalorder %s50, %s51
    %p63 = scmp.eq.s32.totalorder %s20, 2
    %p64 = por %p62, %p63
    %p66 = scmp.ne.s32.totalorder %s51, %s65
    %p67 = scmp.eq.s32.totalorder %s20, 0
    %p68 = por %p66, %p67
    %s70 = sadd.s32 %s69, 1
    %p73 = scmp.eq.s32.totalorder %s14, 2
    %p74 = scmp.ne.s32.totalorder %s69, %s71
    %p75 = scmp.eq.s32.totalorder %s14, 0
    %p76 = por %p74, %p75
    %p77 = scmp.ne.s32.totalorder %s69, %s71
    %p78 = scmp.eq.s32.totalorder %s19, 2
    %p79 = por %p77, %p78
    %p80 = scmp.ne.s32.totalorder %s71, %s72
    %p81 = scmp.eq.s32.totalorder %s19, 0
    %p82 = por %p80, %p81
    %p83 = scmp.ne.s32.totalorder %s71, %s72
    %p84 = scmp.eq.s32.totalorder %s20, 2
    %p85 = por %p83, %p84
    %p87 = scmp.ne.s32.totalorder %s72, %s86
    %p88 = scmp.eq.s32.totalorder %s20, 0
    %p89 = por %p87, %p88
    %s91 = sadd.s32 %s90, 1
    %p94 = scmp.eq.s32.totalorder %s14, 2
    %p95 = scmp.ne.s32.totalorder %s90, %s92
    %p96 = scmp.eq.s32.totalorder %s14, 0
    %p97 = por %p95, %p96
    %p98 = scmp.ne.s32.totalorder %s90, %s92
    %p99 = scmp.eq.s32.totalorder %s19, 2
    %p100 = por %p98, %p99
    %p101 = scmp.ne.s32.totalorder %s92, %s93
    %p102 = scmp.eq.s32.totalorder %s19, 0
    %p103 = por %p101, %p102
    %p104 = scmp.ne.s32.totalorder %s92, %s93
    %p105 = scmp.eq.s32.totalorder %s20, 2
    %p106 = por %p104, %p105
    %p108 = scmp.ne.s32.totalorder %s93, %s107
    %p109 = scmp.eq.s32.totalorder %s20, 0
    %p110 = por %p108, %p109
    %s112 = sadd.s32 %s111, 1
    %p115 = scmp.eq.s32.totalorder %s14, 2
    %p116 = scmp.ne.s32.totalorder %s111, %s113
    %p117 = scmp.eq.s32.totalorder %s14, 0
    %p118 = por %p116, %p117
    %p119 = scmp.ne.s32.totalorder %s111, %s113
    %p120 = scmp.eq.s32.totalorder %s19, 2
    %p121 = por %p119, %p120
    %p122 = scmp.ne.s32.totalorder %s113, %s114
    %p123 = scmp.eq.s32.totalorder %s19, 0
    %p124 = por %p122, %p123
    %p125 = scmp.ne.s32.totalorder %s113, %s114
    %p126 = scmp.eq.s32.totalorder %s20, 2
    %p127 = por %p125, %p126
    %p129 = scmp.ne.s32.totalorder %s114, %s128
    %p130 = scmp.eq.s32.totalorder %s20, 0
    %p131 = por %p129, %p130
    %s133 = sadd.s32 %s132, 1
    %p136 = scmp.eq.s32.totalorder %s14, 2
    %p137 = scmp.ne.s32.totalorder %s132, %s134
    %p138 = scmp.eq.s32.totalorder %s14, 0
    %p139 = por %p137, %p138
    %p140 = scmp.ne.s32.totalorder %s132, %s134
    %p141 = scmp.eq.s32.totalorder %s19, 2
    %p142 = por %p140, %p141
    %p143 = scmp.ne.s32.totalorder %s134, %s135
    %p144 = scmp.eq.s32.totalorder %s19, 0
    %p145 = por %p143, %p144
    %p146 = scmp.ne.s32.totalorder %s134, %s135
    %p147 = scmp.eq.s32.totalorder %s20, 2
    %p148 = por %p146, %p147
    %p150 = scmp.ne.s32.totalorder %s135, %s149
    %p151 = scmp.eq.s32.totalorder %s20, 0
    %p152 = por %p150, %p151
    %s154 = sadd.s32 %s153, 1
    %p157 = scmp.eq.s32.totalorder %s14, 2
    %p158 = scmp.ne.s32.totalorder %s153, %s155
    %p159 = scmp.eq.s32.totalorder %s14, 0
    %p160 = por %p158, %p159
    %p161 = scmp.ne.s32.totalorder %s153, %s155
    %p162 = scmp.eq.s32.totalorder %s19, 2
    %p163 = por %p161, %p162
    %p164 = scmp.ne.s32.totalorder %s155, %s156
    %p165 = scmp.eq.s32.totalorder %s19, 0
    %p166 = por %p164, %p165
    %p167 = scmp.ne.s32.totalorder %s155, %s156
    %p168 = scmp.eq.s32.totalorder %s20, 2
    %p169 = por %p167, %p168
    %p171 = scmp.ne.s32.totalorder %s156, %s170
    %p172 = scmp.eq.s32.totalorder %s20, 0
    %p173 = por %p171, %p172
    %s174 = ssub.s32 %s14, %s21
    %p175 = scmp.eq.s32.totalorder %s174, 0
    %s177 = sadd.s32 %s176, 1
    %s178 = scalar_select %p175, %s176, %s177
    %p181 = pneg %p175
    %p182 = scmp.eq.s32.totalorder %s14, 2
    %p183 = por %p181, %p182
    %p184 = scmp.ne.s32.totalorder %s176, %s179
    %p185 = scmp.eq.s32.totalorder %s14, 0
    %p186 = por %p184, %p185
    %p187 = scmp.ne.s32.totalorder %s176, %s179
    %p188 = scmp.eq.s32.totalorder %s19, 2
    %p189 = por %p187, %p188
    %p190 = scmp.ne.s32.totalorder %s179, %s180
    %p191 = scmp.eq.s32.totalorder %s19, 0
    %p192 = por %p190, %p191
    %p193 = scmp.ne.s32.totalorder %s179, %s180
    %p194 = scmp.eq.s32.totalorder %s20, 2
    %p195 = por %p193, %p194
    %p197 = scmp.ne.s32.totalorder %s180, %s196
    %p198 = scmp.eq.s32.totalorder %s20, 0
    %p199 = por %p197, %p198
    %s200 = ssub.s32 %s14, %s21
    %p201 = scmp.eq.s32.totalorder %s200, 0
    %s203 = sadd.s32 %s202, 1
    %s204 = scalar_select %p201, %s202, %s203
    %p207 = pneg %p201
    %p208 = scmp.eq.s32.totalorder %s14, 2
    %p209 = por %p207, %p208
    %p210 = scmp.ne.s32.totalorder %s202, %s205
    %p211 = scmp.eq.s32.totalorder %s14, 0
    %p212 = por %p210, %p211
    %p213 = scmp.ne.s32.totalorder %s202, %s205
    %p214 = scmp.eq.s32.totalorder %s19, 2
    %p215 = por %p213, %p214
    %p216 = scmp.ne.s32.totalorder %s205, %s206
    %p217 = scmp.eq.s32.totalorder %s19, 0
    %p218 = por %p216, %p217
    %p219 = scmp.ne.s32.totalorder %s205, %s206
    %p220 = scmp.eq.s32.totalorder %s20, 2
    %p221 = por %p219, %p220
    %p223 = scmp.ne.s32.totalorder %s206, %s222
    %p224 = scmp.eq.s32.totalorder %s20, 0
    %p225 = por %p223, %p224
    %p226 = scmp.le.s32.totalorder 1, %s14
    %p227 = scmp.lt.s32.totalorder %s14, 4
    %p228 = pnand %p226, %p227
    %p229 = pneg %p228
    // Predicated region
    $region9: #{encoder_forward.1} parent=5 // pred_check
      _
    $region10: #{encoder_forward.1} parent=5 // pred_check_branch
      %231 = sbr.rel (%p228) target = $region12
    $region11: #{encoder_forward.1} parent=5 // pred_region
      %s232 = ssub.s32 %s14, 1
      // Predicated region
      $region13: #{encoder_forward.1} parent=11 // pred_check
        %p233 = pneg %p61
      $region14: #{encoder_forward.1} parent=11 // pred_check_branch
        %235 = sbr.rel (%p233) target = $region16
      $region15: #{encoder_forward.1} parent=11 // pred_region
        _
      $region16: #{encoder_forward.1} parent=11 // pred_fallthru
        _
      // Predicated region
      $region17: #{encoder_forward.1} parent=11 // pred_check
        %p236 = pneg %p82
      $region18: #{encoder_forward.1} parent=11 // pred_check_branch
        %238 = sbr.rel (%p236) target = $region20
      $region19: #{encoder_forward.1} parent=11 // pred_region
        _
      $region20: #{encoder_forward.1} parent=11 // pred_fallthru
        _
      // Predicated region
      $region21: #{encoder_forward.1} parent=11 // pred_check
        %p239 = pneg %p103
      $region22: #{encoder_forward.1} parent=11 // pred_check_branch
        %241 = sbr.rel (%p239) target = $region24
      $region23: #{encoder_forward.1} parent=11 // pred_region
        _
      $region24: #{encoder_forward.1} parent=11 // pred_fallthru
        _
      // Predicated region
      $region25: #{encoder_forward.1} parent=11 // pred_check
        %p242 = pneg %p124
      $region26: #{encoder_forward.1} parent=11 // pred_check_branch
        %244 = sbr.rel (%p242) target = $region28
      $region27: #{encoder_forward.1} parent=11 // pred_region
        _
      $region28: #{encoder_forward.1} parent=11 // pred_fallthru
        _
      // Predicated region
      $region29: #{encoder_forward.1} parent=11 // pred_check
        %p245 = pneg %p145
      $region30: #{encoder_forward.1} parent=11 // pred_check_branch
        %247 = sbr.rel (%p245) target = $region32
      $region31: #{encoder_forward.1} parent=11 // pred_region
        _
      $region32: #{encoder_forward.1} parent=11 // pred_fallthru
        _
      // Predicated region
      $region33: #{encoder_forward.1} parent=11 // pred_check
        %p248 = pneg %p166
      $region34: #{encoder_forward.1} parent=11 // pred_check_branch
        %250 = sbr.rel (%p248) target = $region36
      $region35: #{encoder_forward.1} parent=11 // pred_region
        _
      $region36: #{encoder_forward.1} parent=11 // pred_fallthru
        _
    $region12: #{encoder_forward.1} parent=5 // pred_fallthru
      _
    %p251 = scmp.lt.s32.totalorder %s14, 3
    // Predicated region
    $region37: #{encoder_forward.1} parent=5 // pred_check
      %p252 = pneg %p251
    $region38: #{encoder_forward.1} parent=5 // pred_check_branch
      %254 = sbr.rel (%p252) target = $region40
    $region39: #{encoder_forward.1} parent=5 // pred_region
      // Predicated region
      $region41: #{encoder_forward.1} parent=39 // pred_check
        %p255 = pneg %p34
      $region42: #{encoder_forward.1} parent=39 // pred_check_branch
        %257 = sbr.rel (%p255) target = $region44
      $region43: #{encoder_forward.1} parent=39 // pred_region
        %p258 = scmp.lt.s32.totalorder %s14, 2
        %s259 = scalar_select %p258, %s14, 2
        %s260 = smul.addr %s259, 8
        %s261 = scalar_lea.vmem %s0, %s260
      $region44: #{encoder_forward.1} parent=39 // pred_fallthru
        _
      // Predicated region
      $region45: #{encoder_forward.1} parent=39 // pred_check
        %p262 = pneg %p186
      $region46: #{encoder_forward.1} parent=39 // pred_check_branch
        %264 = sbr.rel (%p262) target = $region48
      $region47: #{encoder_forward.1} parent=39 // pred_region
        %p265 = scmp.lt.s32.totalorder %s14, 2
        %s266 = scalar_select %p265, %s14, 2
        %s267 = smul.addr %s266, 8
        %s268 = scalar_lea.vmem %s7, %s267
      $region48: #{encoder_forward.1} parent=39 // pred_fallthru
        _
    $region40: #{encoder_forward.1} parent=5 // pred_fallthru
      _
    %p269 = scmp.le.s32.totalorder 1, %s14
    %p270 = scmp.lt.s32.totalorder %s14, 4
    %p271 = pnand %p269, %p270
    %p272 = pneg %p271
    // Predicated region
    $region49: #{encoder_forward.1} parent=5 // pred_check
      _
    $region50: #{encoder_forward.1} parent=5 // pred_check_branch
      %274 = sbr.rel (%p271) target = $region52
    $region51: #{encoder_forward.1} parent=5 // pred_region
      %s275 = ssub.s32 %s14, 1
      %p276 = scmp.lt.s32.totalorder %s19, 2
      %s277 = scalar_select %p276, %s19, 2
      %s278 = smul.addr %s277, 8
      %s279 = scalar_lea.vmem %s0, %s278
      %p280 = pneg %p40
      %p281 = pneg %p37
      %p282 = pneg %p61
      %p283 = pneg %p58
      %p284 = pneg %p82
      %p285 = pneg %p79
      %p286 = pneg %p103
      %p287 = pneg %p100
      %p288 = pneg %p124
      %p289 = pneg %p121
      %p290 = pneg %p145
      %p291 = pneg %p142
      %p292 = pneg %p166
      %p293 = pneg %p163
      %p294 = scmp.lt.s32.totalorder %s19, 2
      %s295 = scalar_select %p294, %s19, 2
      %s296 = smul.addr %s295, 8
      %s297 = scalar_lea.vmem %s7, %s296
      %p298 = pneg %p192
      %p299 = pneg %p189
      %p300 = pneg %p218
      %p301 = pneg %p215
      %p302 = scmp.lt.s32.totalorder %s19, 2
      %s303 = scalar_select %p302, %s19, 2
      %s304 = smul.addr %s303, 8
      %s305 = scalar_lea.vmem %s8, %s304
      %p306 = scmp.lt.s32.totalorder %s19, 2
      %s307 = scalar_select %p306, %s19, 2
      %s308 = smul.addr %s307, 8
      %s309 = scalar_lea.vmem %s0, %s308
      %p310 = scmp.lt.s32.totalorder %s19, 2
      %s311 = scalar_select %p310, %s19, 2
      %s312 = smul.addr %s311, 8
      %s313 = scalar_lea.vmem %s7, %s312
      %p314 = scmp.lt.s32.totalorder %s19, 2
      %s315 = scalar_select %p314, %s19, 2
      %s316 = smul.addr %s315, 8
      %s317 = scalar_lea.vmem %s8, %s316
      %v318 = vld [vmem:[%s309] sm:$0xff]
      %v319 = vld [vmem:[%s1] sm:$0xff]
      %v320 = vld [vmem:[%s1 + $0x8] sm:$0xff]
      %v321 = vld [vmem:[%s1 + $0x10] sm:$0xff]
      %v322 = vld [vmem:[%s1 + $0x18] sm:$0xff]
      %v323 = vld [vmem:[%s2] sm:$0x1]
      %v325 = vlaneseq
      %v326 = vshrl.u32 %v325, 7
      %v327 = vsub.s32 0, %v326
      %v328 = vrot.slane %v323, %v327
      %vm330 = vcmask 261120
      %v332 = vsel %vm330, %v318, 0
      %334 = vmatprep.subr.mxu0 0.0
      %335 = vmatpush1.msra.mxu0 %v319
      %336 = vmatprep.subr.mxu0 0.0
      %337 = vmatpush1.msra.mxu0 %v320
      %338 = vmatprep.subr.mxu0 0.0
      %339 = vmatpush1.msra.mxu0 %v321
      %340 = vmatprep.subr.mxu0 0.0
      %341 = vmatpush1.msra.mxu0 %v322
      %342 = vmatprep.subr.mxu0 0.0
      %343 = vmatpush1.msra.mxu0 0.0
      %344 = vmatprep.subr.mxu0 0.0
      %345 = vmatpush1.msra.mxu0 0.0
      %346 = vmatprep.subr.mxu0 0.0
      %347 = vmatpush1.msra.mxu0 0.0
      %348 = vmatprep.subr.mxu0 0.0
      %349 = vmatpush1.msra.mxu0 0.0
      %350 = vmatprep.subr.mxu0 0.0
      %351 = vmatpush1.msra.mxu0 0.0
      %352 = vmatprep.subr.mxu0 0.0
      %353 = vmatpush1.msra.mxu0 0.0
      %354 = vmatprep.subr.mxu0 0.0
      %355 = vmatpush1.msra.mxu0 0.0
      %356 = vmatprep.subr.mxu0 0.0
      %357 = vmatpush1.msra.mxu0 0.0
      %358 = vmatprep.subr.mxu0 0.0
      %359 = vmatpush1.msra.mxu0 0.0
      %360 = vmatprep.subr.mxu0 0.0
      %361 = vmatpush1.msra.mxu0 0.0
      %362 = vmatprep.subr.mxu0 0.0
      %363 = vmatpush1.msra.mxu0 0.0
      %364 = vmatprep.subr.mxu0 0.0
      %365 = vmatpush1.msra.mxu0 0.0
      %366 = vmatprep.subr.mxu0 0.0
      %367 = vmatpush1.msra.mxu0 0.0
      %368 = vmatprep.subr.mxu0 0.0
      %369 = vmatpush1.msra.mxu0 0.0
      %370 = vmatprep.subr.mxu0 0.0
      %371 = vmatpush1.msra.mxu0 0.0
      %372 = vmatprep.subr.mxu0 0.0
      %373 = vmatpush1.msra.mxu0 0.0
      %374 = vmatprep.subr.mxu0 0.0
      %375 = vmatpush1.msra.mxu0 0.0
      %376 = vmatprep.subr.mxu0 0.0
      %377 = vmatpush1.msra.mxu0 0.0
      %378 = vmatprep.subr.mxu0 0.0
      %379 = vmatpush1.msra.mxu0 0.0
      %380 = vmatprep.subr.mxu0 0.0
      %381 = vmatpush1.msra.mxu0 0.0
      %382 = vmatprep.subr.mxu0 0.0
      %383 = vmatpush1.msra.mxu0 0.0
      %384 = vmatprep.subr.mxu0 0.0
      %385 = vmatpush1.msra.mxu0 0.0
      %386 = vmatprep.subr.mxu0 0.0
      %387 = vmatpush1.msra.mxu0 0.0
      %388 = vmatprep.subr.mxu0 0.0
      %389 = vmatpush1.msra.mxu0 0.0
      %390 = vmatprep.subr.mxu0 0.0
      %391 = vmatpush1.msra.mxu0 0.0
      %392 = vmatprep.subr.mxu0 0.0
      %393 = vmatpush1.msra.mxu0 0.0
      %394 = vmatprep.subr.mxu0 0.0
      %395 = vmatpush1.msra.mxu0 0.0
      %396 = vmatprep.subr.mxu0 0.0
      %397 = vmatpush1.msra.mxu0 0.0
      %398 = vmatprep.mubr.f32.mxu0 0.0
      %399 = vmatmul.mubr.f32.gmra.mrb[0].mxu0 %v332
      %v400 = vpop.f32.mrb[0].mxu0
      %v401 = vadd.f32 %v328, %v400
      %v402 = vpop.f32.mrb[0].mxu0
      %403 = vdwg.mxu0
      %v404 = vmax.f32 %v401, 0.0
      %v405 = vld [vmem:[%s3] sm:$0xff]
      %v406 = vld [vmem:[%s3 + $0x8] sm:$0xff]
      %v407 = vld [vmem:[%s3 + $0x10] sm:$0xff]
      %v408 = vld [vmem:[%s3 + $0x18] sm:$0xff]
      %v409 = vld [vmem:[%s3 + $0x20] sm:$0xff]
      %v410 = vld [vmem:[%s3 + $0x28] sm:$0xff]
      %v411 = vld [vmem:[%s3 + $0x30] sm:$0xff]
      %v412 = vld [vmem:[%s3 + $0x38] sm:$0xff]
      %v413 = vld [vmem:[%s4] sm:$0x1]
      %v415 = vlaneseq
      %v416 = vshrl.u32 %v415, 7
      %v417 = vsub.s32 0, %v416
      %v418 = vrot.slane %v413, %v417
      %vm420 = vcmask 523264
      %v422 = vsel %vm420, %v404, 0
      %424 = vmatprep.subr.mxu0 0.0
      %425 = vmatpush1.msra.mxu0 %v405
      %426 = vmatprep.subr.mxu0 0.0
      %427 = vmatpush1.msra.mxu0 %v406
      %428 = vmatprep.subr.mxu0 0.0
      %429 = vmatpush1.msra.mxu0 %v407
      %430 = vmatprep.subr.mxu0 0.0
      %431 = vmatpush1.msra.mxu0 %v408
      %432 = vmatprep.subr.mxu0 0.0
      %433 = vmatpush1.msra.mxu0 %v409
      %434 = vmatprep.subr.mxu0 0.0
      %435 = vmatpush1.msra.mxu0 %v410
      %436 = vmatprep.subr.mxu0 0.0
      %437 = vmatpush1.msra.mxu0 %v411
      %438 = vmatprep.subr.mxu0 0.0
      %439 = vmatpush1.msra.mxu0 %v412
      %440 = vmatprep.subr.mxu0 0.0
      %441 = vmatpush1.msra.mxu0 0.0
      %442 = vmatprep.subr.mxu0 0.0
      %443 = vmatpush1.msra.mxu0 0.0
      %444 = vmatprep.subr.mxu0 0.0
      %445 = vmatpush1.msra.mxu0 0.0
      %446 = vmatprep.subr.mxu0 0.0
      %447 = vmatpush1.msra.mxu0 0.0
      %448 = vmatprep.subr.mxu0 0.0
      %449 = vmatpush1.msra.mxu0 0.0
      %450 = vmatprep.subr.mxu0 0.0
      %451 = vmatpush1.msra.mxu0 0.0
      %452 = vmatprep.subr.mxu0 0.0
      %453 = vmatpush1.msra.mxu0 0.0
      %454 = vmatprep.subr.mxu0 0.0
      %455 = vmatpush1.msra.mxu0 0.0
      %456 = vmatprep.subr.mxu0 0.0
      %457 = vmatpush1.msra.mxu0 0.0
      %458 = vmatprep.subr.mxu0 0.0
      %459 = vmatpush1.msra.mxu0 0.0
      %460 = vmatprep.subr.mxu0 0.0
      %461 = vmatpush1.msra.mxu0 0.0
      %462 = vmatprep.subr.mxu0 0.0
      %463 = vmatpush1.msra.mxu0 0.0
      %464 = vmatprep.subr.mxu0 0.0
      %465 = vmatpush1.msra.mxu0 0.0
      %466 = vmatprep.subr.mxu0 0.0
      %467 = vmatpush1.msra.mxu0 0.0
      %468 = vmatprep.subr.mxu0 0.0
      %469 = vmatpush1.msra.mxu0 0.0
      %470 = vmatprep.subr.mxu0 0.0
      %471 = vmatpush1.msra.mxu0 0.0
      %472 = vmatprep.subr.mxu0 0.0
      %473 = vmatpush1.msra.mxu0 0.0
      %474 = vmatprep.subr.mxu0 0.0
      %475 = vmatpush1.msra.mxu0 0.0
      %476 = vmatprep.subr.mxu0 0.0
      %477 = vmatpush1.msra.mxu0 0.0
      %478 = vmatprep.subr.mxu0 0.0
      %479 = vmatpush1.msra.mxu0 0.0
      %480 = vmatprep.subr.mxu0 0.0
      %481 = vmatpush1.msra.mxu0 0.0
      %482 = vmatprep.subr.mxu0 0.0
      %483 = vmatpush1.msra.mxu0 0.0
      %484 = vmatprep.subr.mxu0 0.0
      %485 = vmatpush1.msra.mxu0 0.0
      %486 = vmatprep.subr.mxu0 0.0
      %487 = vmatpush1.msra.mxu0 0.0
      %488 = vmatprep.mubr.f32.mxu0 0.0
      %489 = vmatmul.mubr.f32.gmra.mrb[0].mxu0 %v422
      %v490 = vpop.f32.mrb[0].mxu0
      %v491 = vadd.f32 %v418, %v490
      %v492 = vpop.f32.mrb[0].mxu0
      %493 = vdwg.mxu0
      %v494 = vmax.f32 %v491, 0.0
      %v495 = vld [vmem:[%s5] sm:$0xff]
      %v496 = vld [vmem:[%s5 + $0x8] sm:$0xff]
      %v497 = vld [vmem:[%s5 + $0x10] sm:$0xff]
      %v498 = vld [vmem:[%s5 + $0x18] sm:$0xff]
      %v499 = vld [vmem:[%s6] sm:$0x1]
      %v501 = vlaneseq
      %v502 = vshrl.u32 %v501, 7
      %v503 = vsub.s32 0, %v502
      %v504 = vrot.slane %v499, %v503
      %v507 = vsel %vm330, %v494, 0
      %509 = vmatprep.subr.mxu0 0.0
      %510 = vmatpush1.msra.mxu0 %v495
      %511 = vmatprep.subr.mxu0 0.0
      %512 = vmatpush1.msra.mxu0 %v496
      %513 = vmatprep.subr.mxu0 0.0
      %514 = vmatpush1.msra.mxu0 %v497
      %515 = vmatprep.subr.mxu0 0.0
      %516 = vmatpush1.msra.mxu0 %v498
      %517 = vmatprep.subr.mxu0 0.0
      %518 = vmatpush1.msra.mxu0 0.0
      %519 = vmatprep.subr.mxu0 0.0
      %520 = vmatpush1.msra.mxu0 0.0
      %521 = vmatprep.subr.mxu0 0.0
      %522 = vmatpush1.msra.mxu0 0.0
      %523 = vmatprep.subr.mxu0 0.0
      %524 = vmatpush1.msra.mxu0 0.0
      %525 = vmatprep.subr.mxu0 0.0
      %526 = vmatpush1.msra.mxu0 0.0
      %527 = vmatprep.subr.mxu0 0.0
      %528 = vmatpush1.msra.mxu0 0.0
      %529 = vmatprep.subr.mxu0 0.0
      %530 = vmatpush1.msra.mxu0 0.0
      %531 = vmatprep.subr.mxu0 0.0
      %532 = vmatpush1.msra.mxu0 0.0
      %533 = vmatprep.subr.mxu0 0.0
      %534 = vmatpush1.msra.mxu0 0.0
      %535 = vmatprep.subr.mxu0 0.0
      %536 = vmatpush1.msra.mxu0 0.0
      %537 = vmatprep.subr.mxu0 0.0
      %538 = vmatpush1.msra.mxu0 0.0
      %539 = vmatprep.subr.mxu0 0.0
      %540 = vmatpush1.msra.mxu0 0.0
      %541 = vmatprep.subr.mxu0 0.0
      %542 = vmatpush1.msra.mxu0 0.0
      %543 = vmatprep.subr.mxu0 0.0
      %544 = vmatpush1.msra.mxu0 0.0
      %545 = vmatprep.subr.mxu0 0.0
      %546 = vmatpush1.msra.mxu0 0.0
      %547 = vmatprep.subr.mxu0 0.0
      %548 = vmatpush1.msra.mxu0 0.0
      %549 = vmatprep.subr.mxu0 0.0
      %550 = vmatpush1.msra.mxu0 0.0
      %551 = vmatprep.subr.mxu0 0.0
      %552 = vmatpush1.msra.mxu0 0.0
      %553 = vmatprep.subr.mxu0 0.0
      %554 = vmatpush1.msra.mxu0 0.0
      %555 = vmatprep.subr.mxu0 0.0
      %556 = vmatpush1.msra.mxu0 0.0
      %557 = vmatprep.subr.mxu0 0.0
      %558 = vmatpush1.msra.mxu0 0.0
      %559 = vmatprep.subr.mxu0 0.0
      %560 = vmatpush1.msra.mxu0 0.0
      %561 = vmatprep.subr.mxu0 0.0
      %562 = vmatpush1.msra.mxu0 0.0
      %563 = vmatprep.subr.mxu0 0.0
      %564 = vmatpush1.msra.mxu0 0.0
      %565 = vmatprep.subr.mxu0 0.0
      %566 = vmatpush1.msra.mxu0 0.0
      %567 = vmatprep.subr.mxu0 0.0
      %568 = vmatpush1.msra.mxu0 0.0
      %569 = vmatprep.subr.mxu0 0.0
      %570 = vmatpush1.msra.mxu0 0.0
      %571 = vmatprep.subr.mxu0 0.0
      %572 = vmatpush1.msra.mxu0 0.0
      %573 = vmatprep.mubr.f32.mxu0 0.0
      %574 = vmatmul.mubr.f32.gmra.mrb[0].mxu0 %v507
      %v575 = vpop.f32.mrb[0].mxu0
      %v576 = vadd.f32 %v504, %v575
      %v577 = vpop.f32.mrb[0].mxu0
      %578 = vdwg.mxu0
      %v579 = vmax.f32 %v576, 0.0
      %v580 = vand.u32 2147483647, %v576
      %v581 = vsub.f32 0.0, %v580
      %v582 = vmul.f32 %v581, 1.442695
      %v583 = vpow.pop %v582
      %v584 = vadd.f32 %v583, 1.0
      %v585 = vlog2.pop %v584
      %v586 = vmul.f32 %v585, 0.6931472
      %v587 = vmul.f32 -0.5, %v583
      %v588 = vadd.f32 %v587, 1.0
      %v589 = vmul.f32 %v588, %v583
      %v590 = vand.u32 2147483647, %v583
      %vm591 = vcmp.lt.f32.partialorder %v590, 0.0004427343
      %v592 = vsel %vm591, %v589, %v586
      %v593 = vadd.f32 %v579, %v592
      %v594 = vmul.f32 %v593, 0.5
      %v595 = vmul.f32 %v594, 1.442695
      %v596 = vpow.pop %v595
      %v597 = vld [vmem:[%s313] sm:$0xff]
      %599 = vrot.lane.b32.xlu0 %v597, 16
      %v600 = vpop.permute.xlu0 %599
      %v602 = vmul.f32 %v596, %v600
      %604 = vrot.lane.b32.xlu0 %v602, 112
      %v605 = vpop.permute.xlu0 %604
      %v607 = vadd.f32 %v576, %v605
      %609 = vrot.lane.b32.xlu0 %v576, 16
      %v610 = vpop.permute.xlu0 %609
      %613 = vrot.lane.b32.xlu0 %v593, 16
      %v614 = vpop.permute.xlu0 %613
      %vm616 = vcmask 130048
      %v617 = vsel %vm616, %v607, %v610
      %v618 = vsel %vm330, %v617, %v614
      %vm619 = vcmask 392192
      %620 = vst.msk [vmem:[%s317] sm:$0xff] %vm619, %v618
      %p621 = scmp.lt.s32.totalorder %s19, 2
      %s622 = scalar_select %p621, %s19, 2
      %s623 = smul.addr %s622, 8
      %s624 = scalar_lea.vmem %s8, %s623
      // Predicated region
      $region53: #{encoder_forward.1} parent=51 // pred_check
        %p625 = pneg %p215
      $region54: #{encoder_forward.1} parent=51 // pred_check_branch
        %627 = sbr.rel (%p625) target = $region56
      $region55: #{encoder_forward.1} parent=51 // pred_region
        _
      $region56: #{encoder_forward.1} parent=51 // pred_fallthru
        _
    $region52: #{encoder_forward.1} parent=5 // pred_fallthru
      _
    %p628 = scmp.le.s32.totalorder 2, %s14
    // Predicated region
    $region57: #{encoder_forward.1} parent=5 // pred_check
      %p629 = pneg %p628
    $region58: #{encoder_forward.1} parent=5 // pred_check_branch
      %631 = sbr.rel (%p629) target = $region60
    $region59: #{encoder_forward.1} parent=5 // pred_region
      %s632 = ssub.s32 %s14, 2
      // Predicated region
      $region61: #{encoder_forward.1} parent=59 // pred_check
        %p633 = pneg %p221
      $region62: #{encoder_forward.1} parent=59 // pred_check_branch
        %635 = sbr.rel (%p633) target = $region64
      $region63: #{encoder_forward.1} parent=59 // pred_region
        %p636 = scmp.lt.s32.totalorder %s20, 2
        %s637 = scalar_select %p636, %s20, 2
        %s638 = smul.addr %s637, 8
        %s639 = scalar_lea.vmem %s8, %s638
      $region64: #{encoder_forward.1} parent=59 // pred_fallthru
        _
    $region60: #{encoder_forward.1} parent=5 // pred_fallthru
      _
  $region6: #{encoder_forward.1} parent=0 // loop_footer
    %s18 = sadd.s32 1, %s14
  $region7: #{encoder_forward.1} parent=0 // loop_footer_branch
    %13 = sbr.rel target = $region3
  $region8: #{encoder_forward.1} parent=0 // loop_exit
    _

</llo_original>
